<compile_context>
chip_gen: v6e
topology: v6e:2x2x1
jax: 0.10.0
libtpu: 0.0.40
codegen_flags: <defaults>
</compile_context>

<pallas_src>
import functools

import jax
import jax.numpy as jnp
import numpy as np
from jax import lax
from jax.experimental import pallas as pl
from jax.experimental.pallas import tpu as pltpu


def _round_up(v: int, m: int) -> int:
    return ((v + m - 1) // m) * m


def _round_down(v: int, m: int) -> int:
    return (v // m) * m


def _vmem_budget_and_limit():
    """Per-generation VMEM budget for pipelined buffers + scoped limit."""
    try:
        cap = int(pltpu.get_tpu_info().vmem_capacity_bytes)
    except Exception:
        kind = ""
        try:
            kind = jax.devices()[0].device_kind.lower()
        except Exception:
            pass
        # v7x has 64 MiB/TC; v5e/v6e have 128 MiB.  Do not halve v5e/v6e budget.
        cap = 64 * 1024 * 1024 if "v7" in kind else 128 * 1024 * 1024
    budget = int(cap * 0.40)                        # double-buffered in/out + temps
    limit = max(int(cap * 0.75), 32 * 1024 * 1024)  # scoped VMEM ceiling (headroom)
    return budget, limit


# ---------------- single-pass path: full reduction row resident ----------------
def _softmax_block_kernel(x_ref, o_ref, *, is_log: bool):
    x = x_ref[...].astype(jnp.float32)
    m = jnp.max(x, axis=-1, keepdims=True)
    z = x - m
    if is_log:
        s = jnp.sum(jnp.exp(z), axis=-1, keepdims=True)
        o_ref[...] = (z - jnp.log(s)).astype(o_ref.dtype)
    else:
        e = jnp.exp(z)
        s = jnp.sum(e, axis=-1, keepdims=True)
        inv = pl.reciprocal(s, approx=True)
        inv = inv * (2.0 - s * inv)  # one Newton step -> ~full f32 accuracy
        o_ref[...] = (e * inv).astype(o_ref.dtype)


# ---------------- fused streaming path: K-tiled online softmax ----------------
def _softmax_stream_kernel(x_ref, o_ref, m_sc, l_sc, *,
                           is_log: bool, K: int, TK: int, n_k: int):
    # Grid axis 1 has 2*n_k steps: steps [0, n_k) accumulate running max/sum in
    # VMEM scratch; steps [n_k, 2*n_k) re-read x and write normalized output.
    k = pl.program_id(1)

    @pl.when(k == 0)  # start of every row block (k resets per row block)
    def _():
        m_sc[...] = jnp.full_like(m_sc, -jnp.inf)
        l_sc[...] = jnp.zeros_like(l_sc)

    @pl.when(k < n_k)
    def _():
        x = x_ref[...].astype(jnp.float32)
        if K % TK != 0:
            # Mask the K tail of the last (partial) lane block.
            col = lax.broadcasted_iota(jnp.int32, x.shape, 1) + k * TK
            x = jnp.where(col < K, x, -jnp.inf)
        m_prev = m_sc[...]
        m_new = jnp.maximum(m_prev, jnp.max(x, axis=-1, keepdims=True))
        l_sc[...] = (l_sc[...] * jnp.exp(m_prev - m_new)
                     + jnp.sum(jnp.exp(x - m_new), axis=-1, keepdims=True))
        m_sc[...] = m_new

    @pl.when(k >= n_k)
    def _():
        z = x_ref[...].astype(jnp.float32) - m_sc[...]
        if is_log:
            o_ref[...] = (z - jnp.log(l_sc[...])).astype(o_ref.dtype)
        else:
            s = l_sc[...]
            inv = pl.reciprocal(s, approx=True)
            inv = inv * (2.0 - s * inv)
            o_ref[...] = (jnp.exp(z) * inv).astype(o_ref.dtype)


def onnx_softmax_v1_v11(x: jax.Array, axis: int = 1, is_log: bool = False,
                        *, k_block: int | None = None) -> jax.Array:
    """ONNX Softmax V1/V11: flatten from `axis`, softmax over last dim, reshape back.

    k_block: optional override to force the K-tiled streaming path with that
    lane-block size (mainly for testing / very large K).
    """
    shape = x.shape
    if x.ndim == 0:
        return jnp.zeros((), x.dtype) if is_log else jnp.ones((), x.dtype)

    axis = axis % x.ndim
    M = int(np.prod(shape[:axis], dtype=np.int64)) if axis > 0 else 1
    K = int(np.prod(shape[axis:], dtype=np.int64))

    in_dtype = x.dtype
    floating = jnp.issubdtype(in_dtype, jnp.floating)
    out_dtype = in_dtype if floating else jnp.float32  # int cast happens in-kernel
    in_item = jnp.dtype(in_dtype).itemsize
    out_item = jnp.dtype(out_dtype).itemsize

    if M == 0 or K == 0:
        return jnp.zeros(shape, out_dtype)

    x2 = x.reshape(M, K)

    # Sublane packing: 8 rows for 4B, 16 for 2B, 32 for 1B dtypes.
    row_align = {4: 8, 2: 16, 1: 32}.get(min(in_item, out_item), 8)

    budget, vmem_limit = _vmem_budget_and_limit()
    # Per-element tile VMEM cost: 2x input bufs + 2x output bufs + ~2 live f32 temps.
    bpe = 2 * in_item + 2 * out_item + 8

    min_rows = M if M < row_align else row_align
    single_pass = (k_block is None) and (bpe * K * min_rows <= budget)

    if single_pass:
        # ---- whole reduction row per block, tile only along M (cdiv grid) ----
        if M <= row_align:
            TM = M  # block dim == full dim is legal even if < sublane tile
        else:
            budget_rows = max(row_align, _round_down(budget // (bpe * K), row_align))
            tm_target = _round_up(pl.cdiv(M, 8), row_align)  # ~8 grid steps
            TM = max(row_align, min(budget_rows, tm_target))
        grid_m = pl.cdiv(M, TM)

        out2 = pl.pallas_call(
            functools.partial(_softmax_block_kernel, is_log=is_log),
            out_shape=jax.ShapeDtypeStruct((M, K), out_dtype),
            grid_spec=pltpu.PrefetchScalarGridSpec(
                num_scalar_prefetch=0,
                grid=(grid_m,),
                in_specs=[pl.BlockSpec((TM, K), lambda i: (i, 0))],
                out_specs=pl.BlockSpec((TM, K), lambda i: (i, 0)),
            ),
            compiler_params=pltpu.CompilerParams(
                dimension_semantics=("parallel",),
                vmem_limit_bytes=vmem_limit,
            ),
            cost_estimate=pl.CostEstimate(
                flops=int(4 * M * K),
                transcendentals=int((2 if is_log else 1) * M * K),
                bytes_accessed=int(M * K * (in_item + out_item)),
            ),
        )(x2)

    else:
        # ---- fused K-tiled streaming (online) softmax: one pallas_call ----
        if M <= row_align:
            TM = M
        else:
            max_tm = max(row_align, _round_down(budget // (bpe * 128), row_align))
            tm_target = _round_up(pl.cdiv(M, 8), row_align)  # ~8 row steps
            TM = max(row_align, min(256, max_tm, tm_target))

        if k_block is not None:
            TK = max(128, _round_up(int(k_block), 128))
        else:
            TK = max(128, _round_down(budget // (bpe * TM), 128))
        TK = min(TK, _round_up(K, 128))
        n_k = pl.cdiv(K, TK)
        grid = (pl.cdiv(M, TM), 2 * n_k)

        out2 = pl.pallas_call(
            functools.partial(_softmax_stream_kernel,
                              is_log=is_log, K=K, TK=TK, n_k=n_k),
            out_shape=jax.ShapeDtypeStruct((M, K), out_dtype),
            grid_spec=pltpu.PrefetchScalarGridSpec(
                num_scalar_prefetch=0,
                grid=grid,
                # Input is read once per pass: K-block index = k mod n_k.
                in_specs=[pl.BlockSpec((TM, TK), lambda i, k: (i, k % n_k))],
                # Output only written during the second pass; during pass 1 the
                # index stays at (i, 0), which pass 2 fully rewrites before the
                # first writeback.
                out_specs=pl.BlockSpec((TM, TK),
                                       lambda i, k: (i, jnp.maximum(k - n_k, 0))),
                scratch_shapes=[pltpu.VMEM((TM, 1), jnp.float32),   # running max
                                pltpu.VMEM((TM, 1), jnp.float32)],  # running sum
            ),
            compiler_params=pltpu.CompilerParams(
                dimension_semantics=("parallel", "arbitrary"),
                vmem_limit_bytes=vmem_limit,
            ),
            cost_estimate=pl.CostEstimate(
                flops=int(6 * M * K),
                transcendentals=int((3 if is_log else 2) * M * K),
                bytes_accessed=int(M * K * (2 * in_item + out_item)),
            ),
        )(x2)

    return out2.reshape(shape)


if __name__ == "__main__":
    key = jax.random.PRNGKey(0)
    k0, k1 = jax.random.split(key)

    # NCHW input, ONNX default axis=1 -> softmax over flattened C*H*W per batch.
    x = jax.random.normal(k0, (2, 4, 16, 16), dtype=jnp.float32)
    ref = jax.nn.softmax(x.reshape(2, -1), axis=-1).reshape(x.shape)
    ref_log = jax.nn.log_softmax(x.reshape(2, -1), axis=-1).reshape(x.shape)

    # Single-pass (whole reduction row resident) path.
    y = jax.block_until_ready(onnx_softmax_v1_v11(x, axis=1, is_log=False))
    np.testing.assert_allclose(np.asarray(y), np.asarray(ref), atol=1e-5, rtol=1e-5)

    y_log = jax.block_until_ready(onnx_softmax_v1_v11(x, axis=1, is_log=True))
    np.testing.assert_allclose(np.asarray(y_log), np.asarray(ref_log), atol=1e-5, rtol=1e-5)

    # Fused streaming (K-tiled online softmax) path, forced via a small k_block.
    y_s = jax.block_until_ready(onnx_softmax_v1_v11(x, axis=1, is_log=False, k_block=256))
    np.testing.assert_allclose(np.asarray(y_s), np.asarray(ref), atol=1e-5, rtol=1e-5)

    y_s_log = jax.block_until_ready(onnx_softmax_v1_v11(x, axis=1, is_log=True, k_block=256))
    np.testing.assert_allclose(np.asarray(y_s_log), np.asarray(ref_log), atol=1e-5, rtol=1e-5)

    # Irregular K (exercises in-kernel K-tail masking) through the streaming path.
    x3 = jax.random.normal(k1, (2, 3, 10, 10), dtype=jnp.float32)
    y3 = jax.block_until_ready(onnx_softmax_v1_v11(x3, axis=1, is_log=False, k_block=128))
    ref3 = jax.nn.softmax(x3.reshape(2, -1), axis=-1).reshape(x3.shape)
    np.testing.assert_allclose(np.asarray(y3), np.asarray(ref3), atol=1e-5, rtol=1e-5)

    # Deeper axis (axis=2) -> more rows, still single-pass.
    y4 = jax.block_until_ready(onnx_softmax_v1_v11(x, axis=2, is_log=False))
    ref4 = jax.nn.softmax(x.reshape(8, -1), axis=-1).reshape(x.shape)
    np.testing.assert_allclose(np.asarray(y4), np.asarray(ref4), atol=1e-5, rtol=1e-5)

    print("KERNEL_OK")
</pallas_src>

<mosaic_0001>
module attributes {stable_mosaic.version = 11 : i64} {
  func.func @_softmax_block_kernel(%arg0: i32, %arg1: memref<2x1024xf32, #tpu.memory_space<vmem>>, %arg2: memref<2x1024xf32, #tpu.memory_space<vmem>>) attributes {dimension_semantics = [#tpu.dimension_semantics<parallel>], iteration_bounds = array<i64: 1>, scalar_prefetch = 0 : i64, scratch_operands = 0 : i64, tpu.core_type = #tpu.core_type<tc>, window_params = [{transform_indices = @transform_0, window_bounds = array<i64: 2, 1024>}, {transform_indices = @transform_1, window_bounds = array<i64: 2, 1024>}]} {
    %c0 = arith.constant 0 : index
    %c0_0 = arith.constant 0 : index
    %0 = vector.load %arg1[%c0, %c0_0] : memref<2x1024xf32, #tpu.memory_space<vmem>>, vector<2x1024xf32>
    %cst = arith.constant dense<0xFF800000> : vector<2xf32>
    %1 = vector.multi_reduction <maximumf>, %0, %cst [1] : vector<2x1024xf32> to vector<2xf32>
    %2 = vector.shape_cast %1 : vector<2xf32> to vector<2x1xf32>
    %3 = vector.broadcast %2 : vector<2x1xf32> to vector<2x1024xf32>
    %4 = arith.subf %0, %3 : vector<2x1024xf32>
    %5 = math.exp %4 : vector<2x1024xf32>
    %cst_1 = arith.constant dense<0.000000e+00> : vector<2xf32>
    %6 = vector.multi_reduction <add>, %5, %cst_1 [1] : vector<2x1024xf32> to vector<2xf32>
    %7 = vector.shape_cast %6 : vector<2xf32> to vector<2x1xf32>
    %8 = tpu.reciprocal %7 {approx = true} : vector<2x1xf32> -> vector<2x1xf32>
    %9 = arith.mulf %7, %8 : vector<2x1xf32>
    %cst_2 = arith.constant 2.000000e+00 : f32
    %10 = vector.broadcast %cst_2 : f32 to vector<2x1xf32>
    %11 = arith.subf %10, %9 : vector<2x1xf32>
    %12 = arith.mulf %8, %11 : vector<2x1xf32>
    %13 = vector.broadcast %12 : vector<2x1xf32> to vector<2x1024xf32>
    %14 = arith.mulf %5, %13 : vector<2x1024xf32>
    %c0_3 = arith.constant 0 : index
    %c0_4 = arith.constant 0 : index
    %15 = vector.load %arg2[%c0_3, %c0_4] : memref<2x1024xf32, #tpu.memory_space<vmem>>, vector<2x1024xf32>
    tpu.vector_store %arg2[%c0_3, %c0_4], %14 {strides = array<i32>} : memref<2x1024xf32, #tpu.memory_space<vmem>>, vector<2x1024xf32>,
    return
  }
  func.func @transform_0(%arg0: i32) -> (i32, i32) {
    %c0_i32 = arith.constant 0 : i32
    %c0_i32_0 = arith.constant 0 : i32
    return %arg0, %c0_i32 : i32, i32
  }
  func.func @transform_1(%arg0: i32) -> (i32, i32) {
    %c0_i32 = arith.constant 0 : i32
    %c0_i32_0 = arith.constant 0 : i32
    return %arg0, %c0_i32 : i32, i32
  }
}

</mosaic_0001>

<llo_original>
// kernel: tpu_custom_call.1
$region0: #{tpu_custom_call.1}
  #allocation0 [shape = 'u32[]', space=smem, size = 0x4, offset = 0x4, fixed_abs, tag = 'smem constant byte address 0x4 - core index']
  #allocation1 [shape = 'u32[144,128]{1,0:T(1,128)}', space=vmem, size = 0x12000, scoped, tag = 'internal scratch']
  %s0 = inlined_call_operand.hbm [shape: f32[2,1024], index: 0, kind: input, shape index: {}]
  %s1 = inlined_call_operand.hbm [shape: f32[2,1024], index: 1, kind: output, shape index: {}]
  %s2 = sld [smem:[#allocation0]]
  $region18: #{tpu_custom_call.1} parent=0
    _
  %s4 = ssub.s32 1, %s2
  %s5 = scalar_select 0, %s4, %s2
  $region1: #{tpu_custom_call.1} parent=0
    #allocation2 [shape = 'u8[8192]{0}', space=vmem, size = 0x2000, scoped, tag = 'input window, operand 0, single buffered']
    #allocation3 [shape = 's32[1]{0}', space=sflag, size = 0x4, scoped, tag = 'scoped memory for tpu_custom_call.1']
    #allocation4 [shape = 's32[1]{0}', space=sflag, size = 0x4, scoped, tag = 'scoped memory for tpu_custom_call.1']
    #allocation5 [shape = 'u8[8192]{0}', space=vmem, size = 0x2000, scoped, tag = 'output window, operand 0, single buffered']
    %6 = vsyncpa [#allocation3], 0
    %7 = vsyncpa [#allocation4], 0
    // Predicated region
    $region2: #{tpu_custom_call.1} parent=1 // pred_check
      _
    $region3: #{tpu_custom_call.1} parent=1 // pred_check_branch
      %9 = sbr.rel (0) target = $region5
    $region4: #{tpu_custom_call.1} parent=1 // pred_region
      %s11 = ssub.s32 256, 256
      %12 = vsyncadd [#allocation3], %s11
      %s14 = sshll.u32 [#allocation2], 4
      %s15 = int_to_ptr.vmem [resolvable:$true] %s14
      %17 = dma.hbm_to_vmem [thread:$0]  %s0, 256, %s15, [#allocation3]
    $region5: #{tpu_custom_call.1} parent=1 // pred_fallthru
      _
    // Predicated region
    $region6: #{tpu_custom_call.1} parent=1 // pred_check
      _
    $region7: #{tpu_custom_call.1} parent=1 // pred_check_branch
      %19 = sbr.rel (0) target = $region9
    $region8: #{tpu_custom_call.1} parent=1 // pred_region
      %20 = dma.done [#allocation3], 256
    $region9: #{tpu_custom_call.1} parent=1 // pred_fallthru
      _
    %v21 = vld [vmem:[#allocation2] sm:$0xff]
    %v22 = vld [vmem:[#allocation2 + $0x8] sm:$0xff]
    %v25 = vcombine.high %v21, %v21
    %v27 = vunpack.c.l.s4 1983009808
    %v28 = vunpack.c.0.s8 %v27
    %v29 = vlaneseq
    %v30 = vshrl.u32 %v29, 7
    %v31 = vsub.s32 %v28, %v30
    %v32 = vrot.slane %v21, %v31
    %v34 = vunpack.c.l.s4 1983009808
    %v35 = vunpack.c.0.s8 %v34
    %v36 = vlaneseq
    %v37 = vshrl.u32 %v36, 7
    %v38 = vsub.s32 %v35, %v37
    %v39 = vrot.slane %v25, %v38
    %v40 = vcombine.high %v32, %v32
    %v41 = vcombine.high %v39, %v39
    %v42 = vcombine.high %v22, %v22
    %v44 = vunpack.c.l.s4 1983009808
    %v45 = vunpack.c.0.s8 %v44
    %v46 = vlaneseq
    %v47 = vshrl.u32 %v46, 7
    %v48 = vsub.s32 %v45, %v47
    %v49 = vrot.slane %v22, %v48
    %v51 = vunpack.c.l.s4 1983009808
    %v52 = vunpack.c.0.s8 %v51
    %v53 = vlaneseq
    %v54 = vshrl.u32 %v53, 7
    %v55 = vsub.s32 %v52, %v54
    %v56 = vrot.slane %v42, %v55
    %v57 = vcombine.high %v49, %v49
    %v58 = vcombine.high %v56, %v56
    %vm67 = vcmask 1041408
    %v68 = vsel %vm67, %v32, -inf
    %v69 = vsel %vm67, %v40, -inf
    %v70 = vsel %vm67, %v39, -inf
    %v71 = vsel %vm67, %v41, -inf
    %v72 = vsel %vm67, %v49, -inf
    %v73 = vmax.f32 %v68, %v72
    %v74 = vsel %vm67, %v57, -inf
    %v75 = vmax.f32 %v69, %v74
    %v76 = vsel %vm67, %v56, -inf
    %v77 = vmax.f32 %v70, %v76
    %v78 = vsel %vm67, %v58, -inf
    %v79 = vmax.f32 %v71, %v78
    %v80 = vmax.f32 %v73, %v75
    %v81 = vmax.f32 %v77, %v79
    %v82 = vmax.f32 %v80, %v81
    %83 = vmax.xlane.f32.xlu0 %v82
    %v84 = vpop.xlane.xlu0 %83
    %v87 = vunpack.c.l.s4 269488144
    %v88 = vunpack.c.0.s8 %v87
    %v89 = vlaneseq
    %v90 = vshrl.u32 %v89, 7
    %v91 = vsub.s32 %v88, %v90
    %v92 = vrot.slane %v84, %v91
    %v94 = vsub.f32 %v21, %v92
    %v95 = vsub.f32 %v22, %v92
    %v96 = vmul.f32 %v94, 1.442695
    %v97 = vpow.pop %v96
    %v98 = vmul.f32 %v95, 1.442695
    %v99 = vpow.pop %v98
    %v102 = vcombine.high %v97, %v97
    %v104 = vunpack.c.l.s4 1983009808
    %v105 = vunpack.c.0.s8 %v104
    %v106 = vlaneseq
    %v107 = vshrl.u32 %v106, 7
    %v108 = vsub.s32 %v105, %v107
    %v109 = vrot.slane %v97, %v108
    %v111 = vunpack.c.l.s4 1983009808
    %v112 = vunpack.c.0.s8 %v111
    %v113 = vlaneseq
    %v114 = vshrl.u32 %v113, 7
    %v115 = vsub.s32 %v112, %v114
    %v116 = vrot.slane %v102, %v115
    %v117 = vcombine.high %v109, %v109
    %v118 = vcombine.high %v116, %v116
    %v119 = vcombine.high %v99, %v99
    %v121 = vunpack.c.l.s4 1983009808
    %v122 = vunpack.c.0.s8 %v121
    %v123 = vlaneseq
    %v124 = vshrl.u32 %v123, 7
    %v125 = vsub.s32 %v122, %v124
    %v126 = vrot.slane %v99, %v125
    %v128 = vunpack.c.l.s4 1983009808
    %v129 = vunpack.c.0.s8 %v128
    %v130 = vlaneseq
    %v131 = vshrl.u32 %v130, 7
    %v132 = vsub.s32 %v129, %v131
    %v133 = vrot.slane %v119, %v132
    %v134 = vcombine.high %v126, %v126
    %v135 = vcombine.high %v133, %v133
    %v144 = vsel %vm67, %v109, 0.0
    %v145 = vsel %vm67, %v117, 0.0
    %v146 = vadd.f32 %v144, %v145
    %v147 = vsel %vm67, %v116, 0.0
    %v148 = vadd.f32 %v146, %v147
    %v149 = vsel %vm67, %v118, 0.0
    %v150 = vadd.f32 %v148, %v149
    %v151 = vsel %vm67, %v126, 0.0
    %v152 = vadd.f32 %v150, %v151
    %v153 = vsel %vm67, %v134, 0.0
    %v154 = vadd.f32 %v152, %v153
    %v155 = vsel %vm67, %v133, 0.0
    %v156 = vadd.f32 %v154, %v155
    %v157 = vsel %vm67, %v135, 0.0
    %v158 = vadd.f32 %v156, %v157
    %159 = vadd.xlane.f32.xlu0 %v158
    %v160 = vpop.xlane.xlu0 %159
    %v161 = vrcp.pop %v160
    %v162 = vmul.f32 %v160, %v161
    %v163 = vsub.f32 2.0, %v162
    %v164 = vmul.f32 %v161, %v163
    %v167 = vunpack.c.l.s4 269488144
    %v168 = vunpack.c.0.s8 %v167
    %v169 = vlaneseq
    %v170 = vshrl.u32 %v169, 7
    %v171 = vsub.s32 %v168, %v170
    %v172 = vrot.slane %v164, %v171
    %v174 = vmul.f32 %v97, %v172
    %v175 = vmul.f32 %v99, %v172
    %176 = vst [vmem:[#allocation5] sm:$0xff] %v174
    %177 = vst [vmem:[#allocation5 + $0x8] sm:$0xff] %v175
    // Predicated region
    $region10: #{tpu_custom_call.1} parent=1 // pred_check
      _
    $region11: #{tpu_custom_call.1} parent=1 // pred_check_branch
      %179 = sbr.rel (0) target = $region13
    $region12: #{tpu_custom_call.1} parent=1 // pred_region
      %s181 = ssub.s32 256, 256
      %182 = vsyncadd [#allocation4], %s181
      %s184 = sshll.u32 [#allocation5], 4
      %s185 = int_to_ptr.vmem [resolvable:$true] %s184
      %187 = dma.vmem_to_hbm [thread:$0]  %s185, 256, %s1, [#allocation4]
    $region13: #{tpu_custom_call.1} parent=1 // pred_fallthru
      _
    // Predicated region
    $region14: #{tpu_custom_call.1} parent=1 // pred_check
      _
    $region15: #{tpu_custom_call.1} parent=1 // pred_check_branch
      %189 = sbr.rel (0) target = $region17
    $region16: #{tpu_custom_call.1} parent=1 // pred_region
      %190 = dma.done [#allocation4], 256
    $region17: #{tpu_custom_call.1} parent=1 // pred_fallthru
      _
    %191 = vsyncpa [#allocation3], 1
    %192 = vsyncpa [#allocation4], 1

</llo_original>
